<compile_context>
chip_gen: v5e
topology: v5e:2x2
jax: 0.10.0
libtpu: 0.0.40
codegen_flags: <defaults>
</compile_context>

<pallas_src>
import functools

import jax
import jax.numpy as jnp
from jax.experimental import pallas as pl
from jax.experimental.pallas import tpu as pltpu


def _round_up(x, m):
    return (x + m - 1) // m * m


def vae_encode_kernel(x_ref, eps_ref, w1_ref, w2_ref, w3_ref, wh_ref, b_ref,
                      out_ref, *, l1, l2, l3, latent, b_offs):
    # Unpack biases from the single packed [1, Wb] slab (static, 128-aligned
    # lane offsets -> cheap slices, one input DMA instead of four).
    o1, o2, o3, oh = b_offs
    b1 = b_ref[:, o1:o1 + l1]
    b2 = b_ref[:, o2:o2 + l2]
    b3 = b_ref[:, o3:o3 + l3]
    bh = b_ref[:, oh:oh + 2 * latent]

    # bf16 operands for the MXU; accumulate and do elementwise math in f32.
    # (no-op if the caller already supplies bf16 x)
    x = x_ref[...].astype(jnp.bfloat16)

    # encode_4d: Linear -> ReLU -> Linear -> ReLU -> Linear -> ReLU
    h1 = jnp.dot(x, w1_ref[...], preferred_element_type=jnp.float32) + b1
    h1 = jnp.maximum(h1, 0.0).astype(jnp.bfloat16)
    h2 = jnp.dot(h1, w2_ref[...], preferred_element_type=jnp.float32) + b2
    h2 = jnp.maximum(h2, 0.0).astype(jnp.bfloat16)
    h3 = jnp.dot(h2, w3_ref[...], preferred_element_type=jnp.float32) + b3
    h3 = jnp.maximum(h3, 0.0).astype(jnp.bfloat16)

    # Fused mu || log_var head: single matmul on [layer_3d, 2*latent] weights.
    heads = jnp.dot(h3, wh_ref[...], preferred_element_type=jnp.float32) + bh

    # reparameterize: z = eps * exp(0.5 * log_var) + mu   (EUP exp, f32).
    # Slice heads only where needed for z; heads itself is stored contiguously.
    mu = heads[:, :latent]
    lv = heads[:, latent:]
    z = eps_ref[...] * jnp.exp(0.5 * lv) + mu

    # Lane-dense output slab [B, out_w] = [mu | lv | z | zero-pad], out_w a
    # multiple of 128 -> unmasked vst writeback.
    pad = out_ref.shape[-1] - 3 * latent
    pieces = [heads, z]
    if pad > 0:
        pieces.append(jnp.zeros((heads.shape[0], pad), jnp.float32))
    out_ref[...] = jnp.concatenate(pieces, axis=-1).astype(out_ref.dtype)


def prepare_params(params):
    """One-time packing OUTSIDE the hot path.

    Transposes PyTorch [out, in] weights to [in, out], casts MXU operands to
    bf16, fuses the mu/log_var head weights, and packs all four biases into a
    single [1, Wb] f32 slab at 128-aligned lane offsets.
    """
    def wt(n):
        return jnp.asarray(params[n]).T.astype(jnp.bfloat16)

    w_head = jnp.concatenate([params["wmu"].T, params["wlv"].T],
                             axis=1).astype(jnp.bfloat16)

    bias_list = [
        jnp.asarray(params["b1"], jnp.float32),
        jnp.asarray(params["b2"], jnp.float32),
        jnp.asarray(params["b3"], jnp.float32),
        jnp.concatenate([params["bmu"], params["blv"]]).astype(jnp.float32),
    ]
    offs = []
    cur = 0
    for b in bias_list:
        offs.append(cur)
        cur = _round_up(cur + int(b.shape[0]), 128)
    b_packed = jnp.zeros((1, cur), jnp.float32)
    for off, b in zip(offs, bias_list):
        b_packed = b_packed.at[0, off:off + b.shape[0]].set(b)

    return dict(w1=wt("w1"), w2=wt("w2"), w3=wt("w3"), wh=w_head,
                b_packed=b_packed, b_offs=tuple(offs))


def vae_encode(x, prepped, eps, *, tile_b=256, grid_threshold=256):
    """x: [B, len_max_molec1Hot] f32/bf16; prepped: output of prepare_params;
    eps: [B, latent] f32 (the randn_like noise). Returns (z, mu, log_var)."""
    B, in_dim = x.shape
    latent = eps.shape[1]
    l1 = prepped["w1"].shape[1]
    l2 = prepped["w2"].shape[1]
    l3 = prepped["w3"].shape[1]
    out_w = _round_up(3 * latent, 128)

    kernel = functools.partial(vae_encode_kernel, l1=l1, l2=l2, l3=l3,
                               latent=latent, b_offs=prepped["b_offs"])

    args = (x, eps,
            prepped["w1"], prepped["w2"], prepped["w3"], prepped["wh"],
            prepped["b_packed"])

    flops = 2 * B * (in_dim * l1 + l1 * l2 + l2 * l3 + l3 * 2 * latent)
    bytes_in = sum(int(a.size) * a.dtype.itemsize for a in args)
    bytes_out = B * out_w * 4
    cost = pl.CostEstimate(flops=flops,
                           transcendentals=B * latent,
                           bytes_accessed=bytes_in + bytes_out)

    out_shape = jax.ShapeDtypeStruct((B, out_w), jnp.float32)

    if B >= grid_threshold and B % tile_b == 0:
        # Batch-gridded path: tile x / eps / out on batch ("parallel" -> both
        # v7x TensorCores); weights & packed bias stay whole resident blocks.
        def whole(a):
            return pl.BlockSpec(a.shape, lambda i: (0, 0))

        grid_spec = pltpu.PrefetchScalarGridSpec(
            num_scalar_prefetch=0,
            grid=(B // tile_b,),
            in_specs=[pl.BlockSpec((tile_b, in_dim), lambda i: (i, 0)),
                      pl.BlockSpec((tile_b, latent), lambda i: (i, 0)),
                      whole(prepped["w1"]), whole(prepped["w2"]),
                      whole(prepped["w3"]), whole(prepped["wh"]),
                      whole(prepped["b_packed"])],
            out_specs=pl.BlockSpec((tile_b, out_w), lambda i: (i, 0)))
        packed = pl.pallas_call(
            kernel,
            out_shape=out_shape,
            grid_spec=grid_spec,
            compiler_params=pltpu.CompilerParams(
                dimension_semantics=("parallel",)),
            cost_estimate=cost,
        )(*args)
    else:
        # Tiny-batch regime (latency / DMA-descriptor bound): grid-less
        # whole-array call, everything in VMEM.
        vmem = pl.BlockSpec(memory_space=pltpu.MemorySpace.VMEM)
        packed = pl.pallas_call(
            kernel,
            out_shape=out_shape,
            in_specs=[vmem] * len(args),
            out_specs=vmem,
            cost_estimate=cost,
        )(*args)

    # Slab layout is [mu | lv | z | pad].
    mu = packed[:, :latent]
    lv = packed[:, latent:2 * latent]
    z = packed[:, 2 * latent:3 * latent]
    return z, mu, lv


def make_params(key, in_dim, layer_1d, layer_2d, layer_3d, latent):
    """Deterministic synthetic parameters; PyTorch Linear layout W:[out,in], b:[out]."""
    ks = jax.random.split(key, 10)

    def lin(kw, kb, fan_in, fan_out):
        bound = 1.0 / jnp.sqrt(fan_in)
        w = jax.random.uniform(kw, (fan_out, fan_in), jnp.float32, -bound, bound)
        b = jax.random.uniform(kb, (fan_out,), jnp.float32, -bound, bound)
        return w, b

    w1, b1 = lin(ks[0], ks[1], in_dim, layer_1d)
    w2, b2 = lin(ks[2], ks[3], layer_1d, layer_2d)
    w3, b3 = lin(ks[4], ks[5], layer_2d, layer_3d)
    wmu, bmu = lin(ks[6], ks[7], layer_3d, latent)
    wlv, blv = lin(ks[8], ks[9], layer_3d, latent)
    return dict(w1=w1, b1=b1, w2=w2, b2=b2, w3=w3, b3=b3,
                wmu=wmu, bmu=bmu, wlv=wlv, blv=blv)


def vae_encode_ref(x, params, eps):
    """Pure-JAX f32 reference mirroring the PyTorch forward."""
    h = jnp.maximum(x @ params["w1"].T + params["b1"], 0.0)
    h = jnp.maximum(h @ params["w2"].T + params["b2"], 0.0)
    h = jnp.maximum(h @ params["w3"].T + params["b3"], 0.0)
    mu = h @ params["wmu"].T + params["bmu"]
    lv = h @ params["wlv"].T + params["blv"]
    z = eps * jnp.exp(0.5 * lv) + mu
    return z, mu, lv


def _check(name, got, ref, atol, rtol):
    ok = jnp.allclose(got, ref, atol=atol, rtol=rtol)
    assert ok, (name, float(jnp.max(jnp.abs(got - ref))))


if __name__ == "__main__":
    # Shapes consistent with the module:
    #   len_max_molec1Hot = 128, layer_1d = 128, layer_2d = 64, layer_3d = 64,
    #   latent_dimension = 32.
    in_dim = 128
    layer_1d, layer_2d, layer_3d, latent = 128, 64, 64, 32

    key = jax.random.PRNGKey(0)
    k_x, k_eps, k_p, k_x2, k_eps2 = jax.random.split(key, 5)
    params = make_params(k_p, in_dim, layer_1d, layer_2d, layer_3d, latent)

    # One-time packing (transpose, bf16 cast, head fusion, bias pack) outside
    # the hot path.
    prepped = prepare_params(params)

    # --- Tiny-batch (grid-less) path, B = 8 ---------------------------------
    B = 8
    x = jax.random.normal(k_x, (B, in_dim), jnp.float32)
    eps = jax.random.normal(k_eps, (B, latent), jnp.float32)  # randn_like(std)
    z, mu, lv = vae_encode(x, prepped, eps)
    jax.block_until_ready((z, mu, lv))

    # Reference is full f32; kernel matmuls use bf16 operands (f32 accumulate),
    # so tolerances are loosened accordingly (z also carries eps * std error).
    z_r, mu_r, lv_r = vae_encode_ref(x, params, eps)
    _check("mu@8", mu, mu_r, 5e-2, 5e-2)
    _check("lv@8", lv, lv_r, 5e-2, 5e-2)
    _check("z@8", z, z_r, 1e-1, 1e-1)

    # --- Batch-gridded path (v7x two-core / MXU-M=256 tiling), B = 512 ------
    B2 = 512
    x2 = jax.random.normal(k_x2, (B2, in_dim), jnp.float32)
    eps2 = jax.random.normal(k_eps2, (B2, latent), jnp.float32)
    z2, mu2, lv2 = vae_encode(x2, prepped, eps2, tile_b=256)
    jax.block_until_ready((z2, mu2, lv2))

    z2_r, mu2_r, lv2_r = vae_encode_ref(x2, params, eps2)
    _check("mu@512", mu2, mu2_r, 5e-2, 5e-2)
    _check("lv@512", lv2, lv2_r, 5e-2, 5e-2)
    _check("z@512", z2, z2_r, 1e-1, 1e-1)

    print("KERNEL_OK")
</pallas_src>

<mosaic_0001>
module attributes {stable_mosaic.version = 11 : i64} {
  func.func @vae_encode_kernel(%arg0: memref<8x128xf32, #tpu.memory_space<vmem>>, %arg1: memref<8x32xf32, #tpu.memory_space<vmem>>, %arg2: memref<128x128xbf16, #tpu.memory_space<vmem>>, %arg3: memref<128x64xbf16, #tpu.memory_space<vmem>>, %arg4: memref<64x64xbf16, #tpu.memory_space<vmem>>, %arg5: memref<64x64xbf16, #tpu.memory_space<vmem>>, %arg6: memref<1x512xf32, #tpu.memory_space<vmem>>, %arg7: memref<8x128xf32, #tpu.memory_space<vmem>>) attributes {dimension_semantics = [], scalar_prefetch = 0 : i64, scratch_operands = 0 : i64, tpu.core_type = #tpu.core_type<tc>} {
    %c0 = arith.constant 0 : index
    %c0_0 = arith.constant 0 : index
    %0 = vector.load %arg6[%c0, %c0_0] : memref<1x512xf32, #tpu.memory_space<vmem>>, vector<1x128xf32>
    %c0_1 = arith.constant 0 : index
    %c128 = arith.constant 128 : index
    %1 = vector.load %arg6[%c0_1, %c128] : memref<1x512xf32, #tpu.memory_space<vmem>>, vector<1x64xf32>
    %c0_2 = arith.constant 0 : index
    %c256 = arith.constant 256 : index
    %2 = vector.load %arg6[%c0_2, %c256] : memref<1x512xf32, #tpu.memory_space<vmem>>, vector<1x64xf32>
    %c0_3 = arith.constant 0 : index
    %c384 = arith.constant 384 : index
    %3 = vector.load %arg6[%c0_3, %c384] : memref<1x512xf32, #tpu.memory_space<vmem>>, vector<1x64xf32>
    %c0_4 = arith.constant 0 : index
    %c0_5 = arith.constant 0 : index
    %4 = vector.load %arg0[%c0_4, %c0_5] : memref<8x128xf32, #tpu.memory_space<vmem>>, vector<8x128xf32>
    %5 = arith.truncf %4 : vector<8x128xf32> to vector<8x128xbf16>
    %c0_6 = arith.constant 0 : index
    %c0_7 = arith.constant 0 : index
    %6 = vector.load %arg2[%c0_6, %c0_7] : memref<128x128xbf16, #tpu.memory_space<vmem>>, vector<128x128xbf16>
    %cst = arith.constant dense<0.000000e+00> : vector<8x128xf32>
    %7 = tpu.matmul %5, %6, %cst {dimension_numbers = #tpu.dot_dimension_numbers<[1], [0], [0], [1], [0, 0, 1, 1], [], []>} : vector<8x128xbf16>, vector<128x128xbf16>, vector<8x128xf32> -> vector<8x128xf32>
    %8 = vector.broadcast %0 : vector<1x128xf32> to vector<8x128xf32>
    %9 = arith.addf %7, %8 : vector<8x128xf32>
    %cst_8 = arith.constant 0.000000e+00 : f32
    %10 = vector.broadcast %cst_8 : f32 to vector<8x128xf32>
    %11 = arith.maximumf %9, %10 : vector<8x128xf32>
    %12 = arith.truncf %11 : vector<8x128xf32> to vector<8x128xbf16>
    %c0_9 = arith.constant 0 : index
    %c0_10 = arith.constant 0 : index
    %13 = vector.load %arg3[%c0_9, %c0_10] : memref<128x64xbf16, #tpu.memory_space<vmem>>, vector<128x64xbf16>
    %cst_11 = arith.constant dense<0.000000e+00> : vector<8x64xf32>
    %14 = tpu.matmul %12, %13, %cst_11 {dimension_numbers = #tpu.dot_dimension_numbers<[1], [0], [0], [1], [0, 0, 1, 1], [], []>} : vector<8x128xbf16>, vector<128x64xbf16>, vector<8x64xf32> -> vector<8x64xf32>
    %15 = vector.broadcast %1 : vector<1x64xf32> to vector<8x64xf32>
    %16 = arith.addf %14, %15 : vector<8x64xf32>
    %cst_12 = arith.constant 0.000000e+00 : f32
    %17 = vector.broadcast %cst_12 : f32 to vector<8x64xf32>
    %18 = arith.maximumf %16, %17 : vector<8x64xf32>
    %19 = arith.truncf %18 : vector<8x64xf32> to vector<8x64xbf16>
    %c0_13 = arith.constant 0 : index
    %c0_14 = arith.constant 0 : index
    %20 = vector.load %arg4[%c0_13, %c0_14] : memref<64x64xbf16, #tpu.memory_space<vmem>>, vector<64x64xbf16>
    %cst_15 = arith.constant dense<0.000000e+00> : vector<8x64xf32>
    %21 = tpu.matmul %19, %20, %cst_15 {dimension_numbers = #tpu.dot_dimension_numbers<[1], [0], [0], [1], [0, 0, 1, 1], [], []>} : vector<8x64xbf16>, vector<64x64xbf16>, vector<8x64xf32> -> vector<8x64xf32>
    %22 = vector.broadcast %2 : vector<1x64xf32> to vector<8x64xf32>
    %23 = arith.addf %21, %22 : vector<8x64xf32>
    %cst_16 = arith.constant 0.000000e+00 : f32
    %24 = vector.broadcast %cst_16 : f32 to vector<8x64xf32>
    %25 = arith.maximumf %23, %24 : vector<8x64xf32>
    %26 = arith.truncf %25 : vector<8x64xf32> to vector<8x64xbf16>
    %c0_17 = arith.constant 0 : index
    %c0_18 = arith.constant 0 : index
    %27 = vector.load %arg5[%c0_17, %c0_18] : memref<64x64xbf16, #tpu.memory_space<vmem>>, vector<64x64xbf16>
    %cst_19 = arith.constant dense<0.000000e+00> : vector<8x64xf32>
    %28 = tpu.matmul %26, %27, %cst_19 {dimension_numbers = #tpu.dot_dimension_numbers<[1], [0], [0], [1], [0, 0, 1, 1], [], []>} : vector<8x64xbf16>, vector<64x64xbf16>, vector<8x64xf32> -> vector<8x64xf32>
    %29 = vector.broadcast %3 : vector<1x64xf32> to vector<8x64xf32>
    %30 = arith.addf %28, %29 : vector<8x64xf32>
    %31 = vector.extract_strided_slice %30 {offsets = [0, 0], sizes = [8, 32], strides = [1, 1]} : vector<8x64xf32> to vector<8x32xf32>
    %32 = vector.extract_strided_slice %30 {offsets = [0, 32], sizes = [8, 32], strides = [1, 1]} : vector<8x64xf32> to vector<8x32xf32>
    %c0_20 = arith.constant 0 : index
    %c0_21 = arith.constant 0 : index
    %33 = vector.load %arg1[%c0_20, %c0_21] : memref<8x32xf32, #tpu.memory_space<vmem>>, vector<8x32xf32>
    %cst_22 = arith.constant 5.000000e-01 : f32
    %34 = vector.broadcast %cst_22 : f32 to vector<8x32xf32>
    %35 = arith.mulf %34, %32 : vector<8x32xf32>
    %36 = math.exp %35 : vector<8x32xf32>
    %37 = arith.mulf %33, %36 : vector<8x32xf32>
    %38 = arith.addf %37, %31 : vector<8x32xf32>
    %cst_23 = arith.constant 0.000000e+00 : f32
    %39 = vector.broadcast %cst_23 : f32 to vector<8x32xf32>
    %40 = tpu.concatenate %30, %38, %39 in 1 : vector<8x64xf32>, vector<8x32xf32>, vector<8x32xf32> -> vector<8x128xf32>
    %c0_24 = arith.constant 0 : index
    %c0_25 = arith.constant 0 : index
    %41 = vector.load %arg7[%c0_24, %c0_25] : memref<8x128xf32, #tpu.memory_space<vmem>>, vector<8x128xf32>
    tpu.vector_store %arg7[%c0_24, %c0_25], %40 {strides = array<i32>} : memref<8x128xf32, #tpu.memory_space<vmem>>, vector<8x128xf32>,
    return
  }
}

</mosaic_0001>

<llo_original>
// kernel: tpu_custom_call.1
$region0: #{tpu_custom_call.1}
  #allocation0 [shape = 'u32[]', space=smem, size = 0x4, offset = 0x4, fixed_abs, tag = 'smem constant byte address 0x4 - core index']
  #allocation1 [shape = 'u32[72,128]{1,0:T(1,128)}', space=vmem, size = 0x9000, scoped, tag = 'internal scratch']
  %s0 = inlined_call_operand.hbm [shape: f32[8,128], index: 0, kind: input, shape index: {}]
  %s1 = inlined_call_operand.hbm [shape: f32[8,32], index: 1, kind: input, shape index: {}]
  %s2 = inlined_call_operand.vmem [shape: bf16[128,128], index: 2, kind: input, shape index: {}]
  %s3 = inlined_call_operand.vmem [shape: bf16[128,64], index: 3, kind: input, shape index: {}]
  %s4 = inlined_call_operand.vmem [shape: bf16[64,64], index: 4, kind: input, shape index: {}]
  %s5 = inlined_call_operand.hbm [shape: bf16[64,64], index: 5, kind: input, shape index: {}]
  %s6 = inlined_call_operand.vmem [shape: f32[1,512], index: 6, kind: input, shape index: {}]
  %s7 = inlined_call_operand.hbm [shape: f32[8,128], index: 7, kind: output, shape index: {}]
  %s8 = sld [smem:[#allocation0]]
  $region50: #{tpu_custom_call.1} parent=0
    _
  %s10 = ssub.s32 1, %s8
  %s11 = scalar_select 0, %s10, %s8
  $region1: #{tpu_custom_call.1} parent=0
    #allocation2 [shape = 'u8[4096]{0}', space=vmem, size = 0x1000, scoped, tag = 'input window, operand 0, single buffered']
    #allocation3 [shape = 's32[1]{0}', space=sflag, size = 0x4, scoped, tag = 'scoped memory for tpu_custom_call.1']
    #allocation4 [shape = 's32[1]{0}', space=sflag, size = 0x4, scoped, tag = 'scoped memory for tpu_custom_call.1']
    #allocation5 [shape = 'u8[4096]{0}', space=vmem, size = 0x1000, scoped, tag = 'input window, operand 1, single buffered']
    #allocation6 [shape = 's32[1]{0}', space=sflag, size = 0x4, scoped, tag = 'scoped memory for tpu_custom_call.1']
    #allocation7 [shape = 'u8[16384]{0}', space=vmem, size = 0x4000, scoped, tag = 'input window, operand 5, single buffered']
    #allocation8 [shape = 'u8[4096]{0}', space=vmem, size = 0x1000, scoped, tag = 'output window, operand 0, single buffered']
    %12 = vsyncpa [#allocation3], 0
    %13 = vsyncpa [#allocation6], 0
    %14 = vsyncpa [#allocation4], 0
    // Predicated region
    $region2: #{tpu_custom_call.1} parent=1 // pred_check
      _
    $region3: #{tpu_custom_call.1} parent=1 // pred_check_branch
      %16 = sbr.rel (0) target = $region5
    $region4: #{tpu_custom_call.1} parent=1 // pred_region
      %18 = vsyncadd [#allocation3], 0
      %s20 = sshll.u32 %s0, 4
      %s21 = int_to_ptr.hbm [resolvable:$true] %s20
      %s22 = sshll.u32 [#allocation2], 4
      %s23 = int_to_ptr.vmem [resolvable:$true] %s22
      %25 = dma.hbm_to_vmem [thread:$0]  %s21, 128, %s23, [#allocation3]
    $region5: #{tpu_custom_call.1} parent=1 // pred_fallthru
      _
    // Predicated region
    $region6: #{tpu_custom_call.1} parent=1 // pred_check
      _
    $region7: #{tpu_custom_call.1} parent=1 // pred_check_branch
      %27 = sbr.rel (0) target = $region9
    $region8: #{tpu_custom_call.1} parent=1 // pred_region
      %29 = vsyncadd [#allocation6], 0
      %s31 = sshll.u32 %s1, 4
      %s32 = int_to_ptr.hbm [resolvable:$true] %s31
      %s33 = sshll.u32 [#allocation5], 4
      %s34 = int_to_ptr.vmem [resolvable:$true] %s33
      %36 = dma.hbm_to_vmem [thread:$0]  %s32, 128, %s34, [#allocation6]
    $region9: #{tpu_custom_call.1} parent=1 // pred_fallthru
      _
    // Predicated region
    $region10: #{tpu_custom_call.1} parent=1 // pred_check
      _
    $region11: #{tpu_custom_call.1} parent=1 // pred_check_branch
      %38 = sbr.rel (0) target = $region13
    $region12: #{tpu_custom_call.1} parent=1 // pred_region
      _
    $region13: #{tpu_custom_call.1} parent=1 // pred_fallthru
      _
    // Predicated region
    $region14: #{tpu_custom_call.1} parent=1 // pred_check
      _
    $region15: #{tpu_custom_call.1} parent=1 // pred_check_branch
      %40 = sbr.rel (0) target = $region17
    $region16: #{tpu_custom_call.1} parent=1 // pred_region
      _
    $region17: #{tpu_custom_call.1} parent=1 // pred_fallthru
      _
    // Predicated region
    $region18: #{tpu_custom_call.1} parent=1 // pred_check
      _
    $region19: #{tpu_custom_call.1} parent=1 // pred_check_branch
      %42 = sbr.rel (0) target = $region21
    $region20: #{tpu_custom_call.1} parent=1 // pred_region
      _
    $region21: #{tpu_custom_call.1} parent=1 // pred_fallthru
      _
    // Predicated region
    $region22: #{tpu_custom_call.1} parent=1 // pred_check
      _
    $region23: #{tpu_custom_call.1} parent=1 // pred_check_branch
      %44 = sbr.rel (0) target = $region25
    $region24: #{tpu_custom_call.1} parent=1 // pred_region
      %46 = vsyncadd [#allocation6], 0
      %s47 = sshll.u32 %s5, 4
      %s48 = int_to_ptr.hbm [resolvable:$true] %s47
      %s49 = sshll.u32 [#allocation7], 4
      %s50 = int_to_ptr.vmem [resolvable:$true] %s49
      %55 = dma.hbm_to_vmem [thread:$0]  %s48, 512, %s50, [#allocation6], 64, 64, 4
    $region25: #{tpu_custom_call.1} parent=1 // pred_fallthru
      _
    // Predicated region
    $region26: #{tpu_custom_call.1} parent=1 // pred_check
      _
    $region27: #{tpu_custom_call.1} parent=1 // pred_check_branch
      %57 = sbr.rel (0) target = $region29
    $region28: #{tpu_custom_call.1} parent=1 // pred_region
      _
    $region29: #{tpu_custom_call.1} parent=1 // pred_fallthru
      _
    // Predicated region
    $region30: #{tpu_custom_call.1} parent=1 // pred_check
      _
    $region31: #{tpu_custom_call.1} parent=1 // pred_check_branch
      %59 = sbr.rel (0) target = $region33
    $region32: #{tpu_custom_call.1} parent=1 // pred_region
      %61 = dma.done [#allocation3], 128
    $region33: #{tpu_custom_call.1} parent=1 // pred_fallthru
      _
    // Predicated region
    $region34: #{tpu_custom_call.1} parent=1 // pred_check
      _
    $region35: #{tpu_custom_call.1} parent=1 // pred_check_branch
      %63 = sbr.rel (0) target = $region37
    $region36: #{tpu_custom_call.1} parent=1 // pred_region
      %65 = dma.done [#allocation6], 128
    $region37: #{tpu_custom_call.1} parent=1 // pred_fallthru
      _
    // Predicated region
    $region38: #{tpu_custom_call.1} parent=1 // pred_check
      _
    $region39: #{tpu_custom_call.1} parent=1 // pred_check_branch
      %67 = sbr.rel (0) target = $region41
    $region40: #{tpu_custom_call.1} parent=1 // pred_region
      %69 = dma.done [#allocation6], 512
    $region41: #{tpu_custom_call.1} parent=1 // pred_fallthru
      _
    %v71 = vld [vmem:[%s6] sm:$0x1]
    %v72 = vld [vmem:[%s6 + $0x1] sm:$0x1]
    %v73 = vld [vmem:[%s6 + $0x2] sm:$0x1]
    %v74 = vld [vmem:[%s6 + $0x3] sm:$0x1]
    %v75 = vld [vmem:[#allocation2] sm:$0xff]
    %v76 = vpack.c.bf16 %v75, %v75
    %v77 = vld [vmem:[%s2] sm:$0xf]
    %v78 = vld [vmem:[%s2 + $0x4] sm:$0xf]
    %v79 = vld [vmem:[%s2 + $0x8] sm:$0xf]
    %v80 = vld [vmem:[%s2 + $0xc] sm:$0xf]
    %v81 = vld [vmem:[%s2 + $0x10] sm:$0xf]
    %v82 = vld [vmem:[%s2 + $0x14] sm:$0xf]
    %v83 = vld [vmem:[%s2 + $0x18] sm:$0xf]
    %v84 = vld [vmem:[%s2 + $0x1c] sm:$0xf]
    %v85 = vld [vmem:[%s2 + $0x20] sm:$0xf]
    %v86 = vld [vmem:[%s2 + $0x24] sm:$0xf]
    %v87 = vld [vmem:[%s2 + $0x28] sm:$0xf]
    %v88 = vld [vmem:[%s2 + $0x2c] sm:$0xf]
    %v89 = vld [vmem:[%s2 + $0x30] sm:$0xf]
    %v90 = vld [vmem:[%s2 + $0x34] sm:$0xf]
    %v91 = vld [vmem:[%s2 + $0x38] sm:$0xf]
    %v92 = vld [vmem:[%s2 + $0x3c] sm:$0xf]
    %v94 = vperm.slane %v71, 0
    %v112 = vunpack.c.l.b16 %v77
    %v113 = vunpack.c.l.b16 %v78
    %v114 = vunpack.c.l.b16 %v79
    %v115 = vunpack.c.l.b16 %v80
    %v116 = vunpack.c.l.b16 %v81
    %v117 = vunpack.c.l.b16 %v82
    %v118 = vunpack.c.l.b16 %v83
    %v119 = vunpack.c.l.b16 %v84
    %v120 = vunpack.c.l.b16 %v85
    %v121 = vunpack.c.l.b16 %v86
    %v122 = vunpack.c.l.b16 %v87
    %v123 = vunpack.c.l.b16 %v88
    %v124 = vunpack.c.l.b16 %v89
    %v125 = vunpack.c.l.b16 %v90
    %v126 = vunpack.c.l.b16 %v91
    %v127 = vunpack.c.l.b16 %v92
    %v128 = vpack.c.b16 %v113, %v112
    %v129 = vpack.c.b16 %v115, %v114
    %v130 = vpack.c.b16 %v117, %v116
    %v131 = vpack.c.b16 %v119, %v118
    %v132 = vpack.c.b16 %v121, %v120
    %v133 = vpack.c.b16 %v123, %v122
    %v134 = vpack.c.b16 %v125, %v124
    %v135 = vpack.c.b16 %v127, %v126
    %144 = vmatpush.bf16.msra.mxu0 %v135
    %145 = vmatpush.bf16.msra.mxu0 %v134
    %146 = vmatpush.bf16.msra.mxu0 %v133
    %147 = vmatpush.bf16.msra.mxu0 %v132
    %148 = vmatpush.bf16.msra.mxu0 %v131
    %149 = vmatpush.bf16.msra.mxu0 %v130
    %150 = vmatpush.bf16.msra.mxu0 %v129
    %151 = vmatpush.bf16.msra.mxu0 %v128
    %152 = vmatmul.bf16.gmra.mxu0 %v76
    %v153 = vpop.f32.mrf.mxu0
    %v154 = vadd.f32 %v94, %v153
    %v155 = vpop.f32.mrf.mxu0
    %156 = vdwg.mxu0
    %v157 = vmax.f32 %v154, 0.0
    %v158 = vpack.c.bf16 %v157, %v157
    %v159 = vld [vmem:[%s3] sm:$0xf]
    %v160 = vld [vmem:[%s3 + $0x4] sm:$0xf]
    %v161 = vld [vmem:[%s3 + $0x8] sm:$0xf]
    %v162 = vld [vmem:[%s3 + $0xc] sm:$0xf]
    %v163 = vld [vmem:[%s3 + $0x10] sm:$0xf]
    %v164 = vld [vmem:[%s3 + $0x14] sm:$0xf]
    %v165 = vld [vmem:[%s3 + $0x18] sm:$0xf]
    %v166 = vld [vmem:[%s3 + $0x1c] sm:$0xf]
    %v167 = vld [vmem:[%s3 + $0x20] sm:$0xf]
    %v168 = vld [vmem:[%s3 + $0x24] sm:$0xf]
    %v169 = vld [vmem:[%s3 + $0x28] sm:$0xf]
    %v170 = vld [vmem:[%s3 + $0x2c] sm:$0xf]
    %v171 = vld [vmem:[%s3 + $0x30] sm:$0xf]
    %v172 = vld [vmem:[%s3 + $0x34] sm:$0xf]
    %v173 = vld [vmem:[%s3 + $0x38] sm:$0xf]
    %v174 = vld [vmem:[%s3 + $0x3c] sm:$0xf]
    %v176 = vperm.slane %v72, 0
    %v194 = vunpack.c.l.b16 %v159
    %v195 = vunpack.c.l.b16 %v160
    %v196 = vunpack.c.l.b16 %v161
    %v197 = vunpack.c.l.b16 %v162
    %v198 = vunpack.c.l.b16 %v163
    %v199 = vunpack.c.l.b16 %v164
    %v200 = vunpack.c.l.b16 %v165
    %v201 = vunpack.c.l.b16 %v166
    %v202 = vunpack.c.l.b16 %v167
    %v203 = vunpack.c.l.b16 %v168
    %v204 = vunpack.c.l.b16 %v169
    %v205 = vunpack.c.l.b16 %v170
    %v206 = vunpack.c.l.b16 %v171
    %v207 = vunpack.c.l.b16 %v172
    %v208 = vunpack.c.l.b16 %v173
    %v209 = vunpack.c.l.b16 %v174
    %v210 = vpack.c.b16 %v195, %v194
    %v211 = vpack.c.b16 %v197, %v196
    %v212 = vpack.c.b16 %v199, %v198
    %v213 = vpack.c.b16 %v201, %v200
    %v214 = vpack.c.b16 %v203, %v202
    %v215 = vpack.c.b16 %v205, %v204
    %v216 = vpack.c.b16 %v207, %v206
    %v217 = vpack.c.b16 %v209, %v208
    %226 = vmatpush.bf16.msra.mxu0 %v217
    %227 = vmatpush.bf16.msra.mxu0 %v216
    %228 = vmatpush.bf16.msra.mxu0 %v215
    %229 = vmatpush.bf16.msra.mxu0 %v214
    %230 = vmatpush.bf16.msra.mxu0 %v213
    %231 = vmatpush.bf16.msra.mxu0 %v212
    %232 = vmatpush.bf16.msra.mxu0 %v211
    %233 = vmatpush.bf16.msra.mxu0 %v210
    %234 = vmatmul.bf16.gmra.mxu0 %v158
    %v235 = vpop.f32.mrf.mxu0
    %v236 = vadd.f32 %v176, %v235
    %v237 = vpop.f32.mrf.mxu0
    %238 = vdwg.mxu0
    %v239 = vmax.f32 %v236, 0.0
    %v240 = vpack.c.bf16 %v239, %v239
    %v241 = vld [vmem:[%s4] sm:$0xf]
    %v242 = vld [vmem:[%s4 + $0x4] sm:$0xf]
    %v243 = vld [vmem:[%s4 + $0x8] sm:$0xf]
    %v244 = vld [vmem:[%s4 + $0xc] sm:$0xf]
    %v245 = vld [vmem:[%s4 + $0x10] sm:$0xf]
    %v246 = vld [vmem:[%s4 + $0x14] sm:$0xf]
    %v247 = vld [vmem:[%s4 + $0x18] sm:$0xf]
    %v248 = vld [vmem:[%s4 + $0x1c] sm:$0xf]
    %v250 = vperm.slane %v73, 0
    %v260 = vunpack.c.l.b16 %v241
    %v261 = vunpack.c.l.b16 %v242
    %v262 = vunpack.c.l.b16 %v243
    %v263 = vunpack.c.l.b16 %v244
    %v264 = vunpack.c.l.b16 %v245
    %v265 = vunpack.c.l.b16 %v246
    %v266 = vunpack.c.l.b16 %v247
    %v267 = vunpack.c.l.b16 %v248
    %v268 = vpack.c.b16 %v261, %v260
    %v269 = vpack.c.b16 %v263, %v262
    %v270 = vpack.c.b16 %v265, %v264
    %v271 = vpack.c.b16 %v267, %v266
    %vm276 = vcmask 523264
    %v278 = vsel %vm276, %v240, 0
    %280 = vmatpush.bf16.msra.mxu0 0
    %281 = vmatpush.bf16.msra.mxu0 0
    %282 = vmatpush.bf16.msra.mxu0 0
    %283 = vmatpush.bf16.msra.mxu0 0
    %284 = vmatpush.bf16.msra.mxu0 %v271
    %285 = vmatpush.bf16.msra.mxu0 %v270
    %286 = vmatpush.bf16.msra.mxu0 %v269
    %287 = vmatpush.bf16.msra.mxu0 %v268
    %288 = vmatmul.bf16.gmra.mxu0 %v278
    %v289 = vpop.f32.mrf.mxu0
    %v290 = vadd.f32 %v250, %v289
    %v291 = vpop.f32.mrf.mxu0
    %292 = vdwg.mxu0
    %v293 = vmax.f32 %v290, 0.0
    %v294 = vpack.c.bf16 %v293, %v293
    %v295 = vld [vmem:[#allocation7] sm:$0xf]
    %v296 = vld [vmem:[#allocation7 + $0x4] sm:$0xf]
    %v297 = vld [vmem:[#allocation7 + $0x8] sm:$0xf]
    %v298 = vld [vmem:[#allocation7 + $0xc] sm:$0xf]
    %v299 = vld [vmem:[#allocation7 + $0x10] sm:$0xf]
    %v300 = vld [vmem:[#allocation7 + $0x14] sm:$0xf]
    %v301 = vld [vmem:[#allocation7 + $0x18] sm:$0xf]
    %v302 = vld [vmem:[#allocation7 + $0x1c] sm:$0xf]
    %v304 = vperm.slane %v74, 0
    %v314 = vunpack.c.l.b16 %v295
    %v315 = vunpack.c.l.b16 %v296
    %v316 = vunpack.c.l.b16 %v297
    %v317 = vunpack.c.l.b16 %v298
    %v318 = vunpack.c.l.b16 %v299
    %v319 = vunpack.c.l.b16 %v300
    %v320 = vunpack.c.l.b16 %v301
    %v321 = vunpack.c.l.b16 %v302
    %v322 = vpack.c.b16 %v315, %v314
    %v323 = vpack.c.b16 %v317, %v316
    %v324 = vpack.c.b16 %v319, %v318
    %v325 = vpack.c.b16 %v321, %v320
    %v331 = vsel %vm276, %v294, 0
    %333 = vmatpush.bf16.msra.mxu0 0
    %334 = vmatpush.bf16.msra.mxu0 0
    %335 = vmatpush.bf16.msra.mxu0 0
    %336 = vmatpush.bf16.msra.mxu0 0
    %337 = vmatpush.bf16.msra.mxu0 %v325
    %338 = vmatpush.bf16.msra.mxu0 %v324
    %339 = vmatpush.bf16.msra.mxu0 %v323
    %340 = vmatpush.bf16.msra.mxu0 %v322
    %341 = vmatmul.bf16.gmra.mxu0 %v331
    %v342 = vpop.f32.mrf.mxu0
    %v343 = vadd.f32 %v304, %v342
    %v344 = vpop.f32.mrf.mxu0
    %345 = vdwg.mxu0
    %v346 = vld [vmem:[#allocation5] sm:$0xff]
    %v347 = vmul.f32 %v343, 0.5
    %v348 = vmul.f32 %v347, 1.442695
    %v349 = vpow.pop %v348
    %351 = vrot.lane.b32.xlu0 %v349, 96
    %v352 = vpop.permute.xlu0 %351
    %v354 = vmul.f32 %v346, %v352
    %v355 = vadd.f32 %v354, %v343
    %357 = vrot.lane.b32.xlu0 %v355, 64
    %v358 = vpop.permute.xlu0 %357
    %v360 = vsel %vm276, %v343, %v358
    %vm361 = vcmask 785408
    %v362 = vsel %vm361, %v360, 0.0
    %363 = vst [vmem:[#allocation8] sm:$0xff] %v362
    // Predicated region
    $region42: #{tpu_custom_call.1} parent=1 // pred_check
      _
    $region43: #{tpu_custom_call.1} parent=1 // pred_check_branch
      %365 = sbr.rel (0) target = $region45
    $region44: #{tpu_custom_call.1} parent=1 // pred_region
      %367 = vsyncadd [#allocation4], 0
      %s369 = sshll.u32 [#allocation8], 4
      %s370 = int_to_ptr.vmem [resolvable:$true] %s369
      %s371 = sshll.u32 %s7, 4
      %s372 = int_to_ptr.hbm [resolvable:$true] %s371
      %374 = dma.vmem_to_hbm [thread:$0]  %s370, 128, %s372, [#allocation4]
    $region45: #{tpu_custom_call.1} parent=1 // pred_fallthru
      _
    // Predicated region
    $region46: #{tpu_custom_call.1} parent=1 // pred_check
      _
    $region47: #{tpu_custom_call.1} parent=1 // pred_check_branch
      %376 = sbr.rel (0) target = $region49
    $region48: #{tpu_custom_call.1} parent=1 // pred_region
      %378 = dma.done [#allocation4], 128
    $region49: #{tpu_custom_call.1} parent=1 // pred_fallthru
      _
    %379 = vsyncpa [#allocation3], 1
    %380 = vsyncpa [#allocation6], 1
    %381 = vsyncpa [#allocation4], 1

</llo_original>
